<compile_context>
chip_gen: v7x
topology: tpu7x:2x2x1
jax: 0.10.0
libtpu: 0.0.40
codegen_flags: <defaults>
</compile_context>

<pallas_src>
import jax
import jax.numpy as jnp
from jax.experimental import pallas as pl
from jax.experimental.pallas import tpu as pltpu


def _round_up(n: int, m: int) -> int:
    return ((n + m - 1) // m) * m


def _pick_tile_b(B: int, max_tile_b: int) -> int:
    """Largest multiple-of-8 tile <= max_tile_b that divides B (0 if none)."""
    cap = min(max_tile_b, B)
    cap -= cap % 8
    for t in range(cap, 7, -8):
        if B % t == 0:
            return t
    return 0


def _regressor_kernel(x_ref, w1t_ref, b1_ref, w2_ref, b2_ref, o_ref):
    # x_ref : (tile_b, in_size)   streamed, double-buffered
    # w1t_ref: (in_size, h_size)  resident in VMEM (w1 pre-transposed)
    # b1_ref : (1, h_size)        resident
    # w2_ref : (1, h_size)        resident (row of the second Linear weight)
    # b2_ref : (1,) in SMEM       scalar bias
    # o_ref  : (tile_b, 1)        output block

    # Layer 1 on the MXU: (tile_b, in) @ (in, h) -> (tile_b, h) in f32.
    h = jnp.dot(x_ref[...], w1t_ref[...], preferred_element_type=jnp.float32)
    h = h + b1_ref[...]                   # bias broadcast across the batch rows
    h = jnp.where(h >= 0, h, 0.1 * h)     # LeakyReLU(0.1) on the VPU

    # Layer 2 (out_size == 1): VPU multiply + lane reduction instead of an
    # N=1 MXU matmul.  Result is (tile_b, 1) and stores directly.
    out = jnp.sum(h * w2_ref[...], axis=1, keepdims=True) + b2_ref[0]
    o_ref[...] = out.astype(o_ref.dtype)


def regressor_forward(x, w1, b1, w2, b2, *, max_tile_b=2048):
    """Forward pass of Regressor.

    Args (PyTorch layouts):
      x : (B, in_size)           activations
      w1: (h_size, in_size)      first Linear weight
      b1: (h_size,)              first Linear bias
      w2: (out_size, h_size)     second Linear weight (out_size must be 1)
      b2: (out_size,)            second Linear bias
    Returns:
      (B, out_size) float32
    """
    B, in_size = x.shape
    h_size = w1.shape[0]
    out_size = w2.shape[0]
    assert out_size == 1, "kernel implements the module default out_size=1"

    x = x.astype(jnp.float32)

    # Prefer a tile that divides B exactly -> no padding copy of x at all.
    tile_b = _pick_tile_b(B, max_tile_b)
    if tile_b:
        b_pad = B
        x_in = x
    else:  # ragged batch: pad once to a multiple-of-8 tile
        tile_b = min(max_tile_b, _round_up(B, 8))
        b_pad = _round_up(B, tile_b)
        x_in = jnp.pad(x, ((0, b_pad - B), (0, 0)))

    # Tiny one-off parameter re-layouts (32x32-ish, negligible).
    w1t = jnp.asarray(w1, jnp.float32).T                 # (in_size, h_size)
    b1_row = jnp.asarray(b1, jnp.float32).reshape(1, h_size)
    w2_row = jnp.asarray(w2, jnp.float32).reshape(1, h_size)
    b2_vec = jnp.asarray(b2, jnp.float32).reshape(out_size)   # (1,) -> SMEM

    grid = (b_pad // tile_b,)

    out = pl.pallas_call(
        _regressor_kernel,
        out_shape=jax.ShapeDtypeStruct((b_pad, 1), jnp.float32),
        grid_spec=pltpu.PrefetchScalarGridSpec(
            num_scalar_prefetch=0,
            grid=grid,
            in_specs=[
                # streamed, double-buffered activation tile (natural layout)
                pl.BlockSpec((tile_b, in_size), lambda i: (i, 0)),
                # weights / biases: constant index_map -> DMA once, resident
                pl.BlockSpec((in_size, h_size), lambda i: (0, 0)),
                pl.BlockSpec((1, h_size), lambda i: (0, 0)),
                pl.BlockSpec((1, h_size), lambda i: (0, 0)),
                # scalar second-layer bias lives in SMEM
                pl.BlockSpec(memory_space=pltpu.MemorySpace.SMEM),
            ],
            out_specs=pl.BlockSpec((tile_b, 1), lambda i: (i, 0)),
        ),
        compiler_params=pltpu.CompilerParams(
            # batch tiles are independent -> shard across TCs on v7x
            dimension_semantics=("parallel",),
            # footprint per step is < 1 MiB even at tile_b=2048; leave the
            # scoped limit explicit so larger feature dims still fit.
            vmem_limit_bytes=32 * 1024 * 1024,
        ),
    )(x_in, w1t, b1_row, w2_row, b2_vec)

    return out[:B]   # (B, 1)


def init_params(key, in_size=32, h_size=32, out_size=1):
    """Xavier-uniform weights (PyTorch Linear layout), biases = 0.01
    (mirrors Regressor.init_weights)."""
    k1, k2 = jax.random.split(key)

    def xavier_uniform(k, fan_out, fan_in):
        limit = jnp.sqrt(6.0 / (fan_in + fan_out))
        return jax.random.uniform(
            k, (fan_out, fan_in), jnp.float32, minval=-limit, maxval=limit
        )

    w1 = xavier_uniform(k1, h_size, in_size)        # (h, in)  == torch weight
    b1 = jnp.full((h_size,), 0.01, jnp.float32)
    w2 = xavier_uniform(k2, out_size, h_size)       # (out, h) == torch weight
    b2 = jnp.full((out_size,), 0.01, jnp.float32)
    return w1, b1, w2, b2


if __name__ == "__main__":
    in_size, h_size, out_size = 32, 32, 1
    batch = 8

    key = jax.random.PRNGKey(0)
    kx, kp = jax.random.split(key)
    x = jax.random.normal(kx, (batch, in_size), jnp.float32)
    w1, b1, w2, b2 = init_params(kp, in_size, h_size, out_size)

    out = regressor_forward(x, w1, b1, w2, b2)
    out = jax.block_until_ready(out)

    # Reference in plain JAX with identical (PyTorch-layout) math.
    h_ref = x @ w1.T + b1[None, :]
    h_ref = jnp.where(h_ref >= 0, h_ref, 0.1 * h_ref)
    ref = h_ref @ w2.T + b2[None, :]

    assert out.shape == (batch, out_size)
    assert jnp.allclose(out, ref, atol=1e-5, rtol=1e-5), "mismatch vs reference"

    print("KERNEL_OK")
</pallas_src>

<mosaic_0001>
module attributes {stable_mosaic.version = 11 : i64} {
  func.func @_regressor_kernel(%arg0: i32, %arg1: memref<8x32xf32, #tpu.memory_space<vmem>>, %arg2: memref<32x32xf32, #tpu.memory_space<vmem>>, %arg3: memref<1x32xf32, #tpu.memory_space<vmem>>, %arg4: memref<1x32xf32, #tpu.memory_space<vmem>>, %arg5: memref<1xf32, #tpu.memory_space<smem>>, %arg6: memref<8x1xf32, #tpu.memory_space<vmem>>) attributes {dimension_semantics = [#tpu.dimension_semantics<parallel>], iteration_bounds = array<i64: 1>, scalar_prefetch = 0 : i64, scratch_operands = 0 : i64, tpu.core_type = #tpu.core_type<tc>, window_params = [{transform_indices = @transform_0, window_bounds = array<i64: 8, 32>}, {pipeline_mode = #tpu.pipeline_mode<synchronous>, transform_indices = @transform_1, window_bounds = array<i64: 32, 32>}, {pipeline_mode = #tpu.pipeline_mode<synchronous>, transform_indices = @transform_2, window_bounds = array<i64: 1, 32>}, {pipeline_mode = #tpu.pipeline_mode<synchronous>, transform_indices = @transform_3, window_bounds = array<i64: 1, 32>}, {transform_indices = @transform_4, window_bounds = array<i64: 1>}, {transform_indices = @transform_5, window_bounds = array<i64: 8, 1>}]} {
    %c0 = arith.constant 0 : index
    %c0_0 = arith.constant 0 : index
    %0 = vector.load %arg1[%c0, %c0_0] : memref<8x32xf32, #tpu.memory_space<vmem>>, vector<8x32xf32>
    %c0_1 = arith.constant 0 : index
    %c0_2 = arith.constant 0 : index
    %1 = vector.load %arg2[%c0_1, %c0_2] : memref<32x32xf32, #tpu.memory_space<vmem>>, vector<32x32xf32>
    %cst = arith.constant dense<0.000000e+00> : vector<8x32xf32>
    %2 = tpu.matmul %0, %1, %cst {dimension_numbers = #tpu.dot_dimension_numbers<[1], [0], [0], [1], [0, 0, 1, 1], [], []>} : vector<8x32xf32>, vector<32x32xf32>, vector<8x32xf32> -> vector<8x32xf32>
    %c0_3 = arith.constant 0 : index
    %c0_4 = arith.constant 0 : index
    %3 = vector.load %arg3[%c0_3, %c0_4] : memref<1x32xf32, #tpu.memory_space<vmem>>, vector<1x32xf32>
    %4 = vector.broadcast %3 : vector<1x32xf32> to vector<8x32xf32>
    %5 = arith.addf %2, %4 : vector<8x32xf32>
    %cst_5 = arith.constant 0.000000e+00 : f32
    %6 = vector.broadcast %cst_5 : f32 to vector<8x32xf32>
    %7 = arith.cmpf oge, %5, %6 : vector<8x32xf32>
    %cst_6 = arith.constant 1.000000e-01 : f32
    %8 = vector.broadcast %cst_6 : f32 to vector<8x32xf32>
    %9 = arith.mulf %8, %5 : vector<8x32xf32>
    %10 = arith.select %7, %5, %9 : vector<8x32xi1>, vector<8x32xf32>
    %c0_7 = arith.constant 0 : index
    %c0_8 = arith.constant 0 : index
    %11 = vector.load %arg4[%c0_7, %c0_8] : memref<1x32xf32, #tpu.memory_space<vmem>>, vector<1x32xf32>
    %12 = vector.broadcast %11 : vector<1x32xf32> to vector<8x32xf32>
    %13 = arith.mulf %10, %12 : vector<8x32xf32>
    %cst_9 = arith.constant dense<0.000000e+00> : vector<8xf32>
    %14 = vector.multi_reduction <add>, %13, %cst_9 [1] : vector<8x32xf32> to vector<8xf32>
    %15 = vector.shape_cast %14 : vector<8xf32> to vector<8x1xf32>
    %c0_10 = arith.constant 0 : index
    %16 = memref.load %arg5[%c0_10] : memref<1xf32, #tpu.memory_space<smem>>
    %17 = vector.broadcast %16 : f32 to vector<8x1xf32>
    %18 = arith.addf %15, %17 : vector<8x1xf32>
    %c0_11 = arith.constant 0 : index
    %c0_12 = arith.constant 0 : index
    %19 = vector.load %arg6[%c0_11, %c0_12] : memref<8x1xf32, #tpu.memory_space<vmem>>, vector<8x1xf32>
    tpu.vector_store %arg6[%c0_11, %c0_12], %18 {strides = array<i32>} : memref<8x1xf32, #tpu.memory_space<vmem>>, vector<8x1xf32>,
    return
  }
  func.func @transform_0(%arg0: i32) -> (i32, i32) {
    %c0_i32 = arith.constant 0 : i32
    %c0_i32_0 = arith.constant 0 : i32
    return %arg0, %c0_i32 : i32, i32
  }
  func.func @transform_1(%arg0: i32) -> (i32, i32) {
    %c0_i32 = arith.constant 0 : i32
    %c0_i32_0 = arith.constant 0 : i32
    %c0_i32_1 = arith.constant 0 : i32
    return %c0_i32, %c0_i32_0 : i32, i32
  }
  func.func @transform_2(%arg0: i32) -> (i32, i32) {
    %c0_i32 = arith.constant 0 : i32
    %c0_i32_0 = arith.constant 0 : i32
    %c0_i32_1 = arith.constant 0 : i32
    return %c0_i32, %c0_i32_0 : i32, i32
  }
  func.func @transform_3(%arg0: i32) -> (i32, i32) {
    %c0_i32 = arith.constant 0 : i32
    %c0_i32_0 = arith.constant 0 : i32
    %c0_i32_1 = arith.constant 0 : i32
    return %c0_i32, %c0_i32_0 : i32, i32
  }
  func.func @transform_4(%arg0: i32) -> i32 {
    %c0_i32 = arith.constant 0 : i32
    %c0_i32_0 = arith.constant 0 : i32
    return %c0_i32 : i32
  }
  func.func @transform_5(%arg0: i32) -> (i32, i32) {
    %c0_i32 = arith.constant 0 : i32
    %c0_i32_0 = arith.constant 0 : i32
    return %arg0, %c0_i32 : i32, i32
  }
}

</mosaic_0001>

<llo_original>
// kernel: tpu_custom_call.1
$region0: #{tpu_custom_call.1}
  #allocation0 [shape = 'u32[]', space=smem, size = 0x4, offset = 0x4, fixed_abs, tag = 'smem constant byte address 0x4 - core index']
  #allocation1 [shape = 'u32[144,128]{1,0:T(1,128)}', space=vmem, size = 0x12000, scoped, tag = 'internal scratch']
  #allocation2 [shape = 'f32[1]{0:T(128)S(6)}', space=smem, size = 0x200, scoped, tag = 'scoped memory for tpu_custom_call.1']
  %s0 = inlined_call_operand.hbm [shape: f32[8,32], index: 0, kind: input, shape index: {}]
  %s1 = inlined_call_operand.hbm [shape: f32[32,32], index: 1, kind: input, shape index: {}]
  %s2 = inlined_call_operand.vmem [shape: f32[1,32], index: 2, kind: input, shape index: {}]
  %s3 = inlined_call_operand.vmem [shape: f32[1,32], index: 3, kind: input, shape index: {}]
  %s4 = inlined_call_operand.<no memory space> [shape: f32[1], index: 4, kind: input, shape index: {}]
  %s5 = inlined_call_operand.vmem [shape: f32[8,1], index: 5, kind: output, shape index: {}]
  %s6 = sld [smem:[#allocation0]]
  $region38: #{tpu_custom_call.1} parent=0
    _
  %s8 = ssub.s32 1, %s6
  %s9 = scalar_select 0, %s8, %s6
  %10 = sst [smem:[#allocation2]] %s4
  $region1: #{tpu_custom_call.1} parent=0
    #allocation3 [shape = 'u8[4096]{0}', space=vmem, size = 0x1000, scoped, tag = 'input window, operand 0, single buffered']
    #allocation4 [shape = 's32[1]{0}', space=sflag, size = 0x4, scoped, tag = 'scoped memory for tpu_custom_call.1']
    #allocation5 [shape = 'u8[16384]{0}', space=vmem, size = 0x4000, scoped, tag = 'input window, operand 1, single buffered']
    #allocation6 [shape = 's32[1]{0}', space=sflag, size = 0x4, scoped, tag = 'scoped memory for tpu_custom_call.1']
    %11 = vsyncpa [#allocation4], 0
    %12 = vsyncpa [#allocation6], 0
    // Predicated region
    $region2: #{tpu_custom_call.1} parent=1 // pred_check
      _
    $region3: #{tpu_custom_call.1} parent=1 // pred_check_branch
      %14 = sbr.rel (0) target = $region5
    $region4: #{tpu_custom_call.1} parent=1 // pred_region
      %s16 = ssub.s32 128, 128
      %17 = vsyncadd [#allocation4], %s16
      %s19 = sshll.u32 [#allocation3], 4
      %s20 = int_to_ptr.vmem [resolvable:$true] %s19
      %22 = dma.hbm_to_vmem [thread:$0]  %s0, 128, %s20, [#allocation4]
    $region5: #{tpu_custom_call.1} parent=1 // pred_fallthru
      _
    // Predicated region
    $region6: #{tpu_custom_call.1} parent=1 // pred_check
      _
    $region7: #{tpu_custom_call.1} parent=1 // pred_check_branch
      %24 = sbr.rel (0) target = $region9
    $region8: #{tpu_custom_call.1} parent=1 // pred_region
      %s26 = ssub.s32 512, 512
      %27 = vsyncadd [#allocation6], %s26
      %s28 = sshll.u32 [#allocation5], 4
      %s29 = int_to_ptr.vmem [resolvable:$true] %s28
      %34 = dma.hbm_to_vmem [thread:$0]  %s1, 512, %s29, [#allocation6], 128, 128, 8
    $region9: #{tpu_custom_call.1} parent=1 // pred_fallthru
      _
    // Predicated region
    $region10: #{tpu_custom_call.1} parent=1 // pred_check
      _
    $region11: #{tpu_custom_call.1} parent=1 // pred_check_branch
      %36 = sbr.rel (0) target = $region13
    $region12: #{tpu_custom_call.1} parent=1 // pred_region
      _
    $region13: #{tpu_custom_call.1} parent=1 // pred_fallthru
      _
    // Predicated region
    $region14: #{tpu_custom_call.1} parent=1 // pred_check
      _
    $region15: #{tpu_custom_call.1} parent=1 // pred_check_branch
      %38 = sbr.rel (0) target = $region17
    $region16: #{tpu_custom_call.1} parent=1 // pred_region
      _
    $region17: #{tpu_custom_call.1} parent=1 // pred_fallthru
      _
    // Predicated region
    $region18: #{tpu_custom_call.1} parent=1 // pred_check
      _
    $region19: #{tpu_custom_call.1} parent=1 // pred_check_branch
      %40 = sbr.rel (0) target = $region21
    $region20: #{tpu_custom_call.1} parent=1 // pred_region
      _
    $region21: #{tpu_custom_call.1} parent=1 // pred_fallthru
      _
    // Predicated region
    $region22: #{tpu_custom_call.1} parent=1 // pred_check
      _
    $region23: #{tpu_custom_call.1} parent=1 // pred_check_branch
      %42 = sbr.rel (0) target = $region25
    $region24: #{tpu_custom_call.1} parent=1 // pred_region
      %43 = dma.done [#allocation4], 128
    $region25: #{tpu_custom_call.1} parent=1 // pred_fallthru
      _
    // Predicated region
    $region26: #{tpu_custom_call.1} parent=1 // pred_check
      _
    $region27: #{tpu_custom_call.1} parent=1 // pred_check_branch
      %45 = sbr.rel (0) target = $region29
    $region28: #{tpu_custom_call.1} parent=1 // pred_region
      %46 = dma.done [#allocation6], 512
    $region29: #{tpu_custom_call.1} parent=1 // pred_fallthru
      _
    %v47 = vld [vmem:[#allocation3] sm:$0xff]
    %v48 = vld [vmem:[#allocation5] sm:$0xff]
    %v49 = vld [vmem:[#allocation5 + $0x8] sm:$0xff]
    %v50 = vld [vmem:[#allocation5 + $0x10] sm:$0xff]
    %v51 = vld [vmem:[#allocation5 + $0x18] sm:$0xff]
    %v52 = vld [vmem:[%s2] sm:$0x1]
    %v54 = vlaneseq
    %v55 = vshrl.u32 %v54, 7
    %v56 = vsub.s32 0, %v55
    %v57 = vrot.slane %v52, %v56
    %vm59 = vcmask 261120
    %v61 = vsel %vm59, %v47, 0
    %63 = vmatprep.subr.mxu0 0.0
    %64 = vmatpush1.msra.mxu0 %v48
    %65 = vmatprep.subr.mxu0 0.0
    %66 = vmatpush1.msra.mxu0 %v49
    %67 = vmatprep.subr.mxu0 0.0
    %68 = vmatpush1.msra.mxu0 %v50
    %69 = vmatprep.subr.mxu0 0.0
    %70 = vmatpush1.msra.mxu0 %v51
    %71 = vmatprep.subr.mxu0 0.0
    %72 = vmatpush1.msra.mxu0 0.0
    %73 = vmatprep.subr.mxu0 0.0
    %74 = vmatpush1.msra.mxu0 0.0
    %75 = vmatprep.subr.mxu0 0.0
    %76 = vmatpush1.msra.mxu0 0.0
    %77 = vmatprep.subr.mxu0 0.0
    %78 = vmatpush1.msra.mxu0 0.0
    %79 = vmatprep.subr.mxu0 0.0
    %80 = vmatpush1.msra.mxu0 0.0
    %81 = vmatprep.subr.mxu0 0.0
    %82 = vmatpush1.msra.mxu0 0.0
    %83 = vmatprep.subr.mxu0 0.0
    %84 = vmatpush1.msra.mxu0 0.0
    %85 = vmatprep.subr.mxu0 0.0
    %86 = vmatpush1.msra.mxu0 0.0
    %87 = vmatprep.subr.mxu0 0.0
    %88 = vmatpush1.msra.mxu0 0.0
    %89 = vmatprep.subr.mxu0 0.0
    %90 = vmatpush1.msra.mxu0 0.0
    %91 = vmatprep.subr.mxu0 0.0
    %92 = vmatpush1.msra.mxu0 0.0
    %93 = vmatprep.subr.mxu0 0.0
    %94 = vmatpush1.msra.mxu0 0.0
    %95 = vmatprep.subr.mxu0 0.0
    %96 = vmatpush1.msra.mxu0 0.0
    %97 = vmatprep.subr.mxu0 0.0
    %98 = vmatpush1.msra.mxu0 0.0
    %99 = vmatprep.subr.mxu0 0.0
    %100 = vmatpush1.msra.mxu0 0.0
    %101 = vmatprep.subr.mxu0 0.0
    %102 = vmatpush1.msra.mxu0 0.0
    %103 = vmatprep.subr.mxu0 0.0
    %104 = vmatpush1.msra.mxu0 0.0
    %105 = vmatprep.subr.mxu0 0.0
    %106 = vmatpush1.msra.mxu0 0.0
    %107 = vmatprep.subr.mxu0 0.0
    %108 = vmatpush1.msra.mxu0 0.0
    %109 = vmatprep.subr.mxu0 0.0
    %110 = vmatpush1.msra.mxu0 0.0
    %111 = vmatprep.subr.mxu0 0.0
    %112 = vmatpush1.msra.mxu0 0.0
    %113 = vmatprep.subr.mxu0 0.0
    %114 = vmatpush1.msra.mxu0 0.0
    %115 = vmatprep.subr.mxu0 0.0
    %116 = vmatpush1.msra.mxu0 0.0
    %117 = vmatprep.subr.mxu0 0.0
    %118 = vmatpush1.msra.mxu0 0.0
    %119 = vmatprep.subr.mxu0 0.0
    %120 = vmatpush1.msra.mxu0 0.0
    %121 = vmatprep.subr.mxu0 0.0
    %122 = vmatpush1.msra.mxu0 0.0
    %123 = vmatprep.subr.mxu0 0.0
    %124 = vmatpush1.msra.mxu0 0.0
    %125 = vmatprep.subr.mxu0 0.0
    %126 = vmatpush1.msra.mxu0 0.0
    %127 = vmatprep.mubr.f32.mxu0 0.0
    %128 = vmatmul.mubr.f32.gmra.mrb[0].mxu0 %v61
    %v129 = vpop.f32.mrb[0].mxu0
    %v130 = vadd.f32 %v57, %v129
    %v131 = vpop.f32.mrb[0].mxu0
    %132 = vdwg.mxu0
    %vm133 = vcmp.ge.f32.partialorder %v130, 0.0
    %v134 = vmul.f32 %v130, 0.1
    %v135 = vsel %vm133, %v130, %v134
    %v136 = vld [vmem:[%s3] sm:$0x1]
    %v138 = vlaneseq
    %v139 = vshrl.u32 %v138, 7
    %v140 = vsub.s32 0, %v139
    %v141 = vrot.slane %v136, %v140
    %v143 = vmul.f32 %v135, %v141
    %v144 = vsel %vm59, %v143, 0.0
    %145 = vadd.xlane.f32.xlu0 %v144
    %v146 = vpop.xlane.xlu0 %145
    %s147 = sld [smem:[#allocation2]]
    %v148 = vstv %s147
    %v149 = vadd.f32 %v146, %v148
    %vm150 = vcmask 7168
    %151 = vst.msk [vmem:[%s5] sm:$0xff] %vm150, %v149
    // Predicated region
    $region30: #{tpu_custom_call.1} parent=1 // pred_check
      _
    $region31: #{tpu_custom_call.1} parent=1 // pred_check_branch
      %153 = sbr.rel (0) target = $region33
    $region32: #{tpu_custom_call.1} parent=1 // pred_region
      _
    $region33: #{tpu_custom_call.1} parent=1 // pred_fallthru
      _
    // Predicated region
    $region34: #{tpu_custom_call.1} parent=1 // pred_check
      _
    $region35: #{tpu_custom_call.1} parent=1 // pred_check_branch
      %155 = sbr.rel (0) target = $region37
    $region36: #{tpu_custom_call.1} parent=1 // pred_region
      _
    $region37: #{tpu_custom_call.1} parent=1 // pred_fallthru
      _
    %156 = vsyncpa [#allocation4], 1
    %157 = vsyncpa [#allocation6], 1

</llo_original>
